<compile_context>
chip_gen: v5e
topology: v5e:2x2
jax: 0.10.0
libtpu: 0.0.40
codegen_flags: <defaults>
</compile_context>

<pallas_src>
import math

import jax
import jax.numpy as jnp
from jax.experimental import pallas as pl
from jax.experimental.pallas import tpu as pltpu


# ----------------------------- kernels --------------------------------------


def _pointer_kernel_flat(refs_ref, q_ref, wt_tiled_ref, vmat_ref, mask_ref, out_ref):
    # Lane-dense path for d_unit < 128.
    # refs_ref     : (BB, N*d_unit)      bf16 (or f32)
    # q_ref        : (BB, d_query)       f32
    # wt_tiled_ref : (d_query, N*d_unit) f32   -- W_l.T tiled N times along lanes
    # vmat_ref     : (N*d_unit, N)       f32   -- block-diagonal v
    # mask_ref     : (BB, N)             int8
    # out_ref      : (BB, N)             f32
    proj = jnp.dot(q_ref[...], wt_tiled_ref[...],
                   preferred_element_type=jnp.float32)          # (BB, N*d_unit) MXU
    x = refs_ref[...].astype(jnp.float32) + proj                # lane-dense VPU add
    t = jnp.tanh(x)                                             # lane-dense EUP tanh
    s = jnp.dot(t, vmat_ref[...],
                preferred_element_type=jnp.float32)             # (BB, N) MXU reduce
    s = 10.0 * jnp.tanh(s)
    out_ref[...] = jnp.where(mask_ref[...] != 0, -jnp.inf, s)


def _pointer_kernel_3d(refs_ref, q_ref, wt_ref, v_ref, mask_ref, out_ref):
    # Fallback path for d_unit >= 128 (lane dim already dense).
    # refs_ref : (BB, N, d_unit) bf16/f32, q_ref: (BB, d_query) f32
    # wt_ref   : (d_query, d_unit) f32,   v_ref: (1, d_unit) f32
    # mask_ref : (BB, N) int8,            out_ref: (BB, N) f32
    proj = jnp.dot(q_ref[...], wt_ref[...],
                   preferred_element_type=jnp.float32)          # (BB, d_unit)
    t = jnp.tanh(refs_ref[...].astype(jnp.float32) + proj[:, None, :])
    s = jnp.sum(v_ref[...] * t, axis=-1)                        # (BB, N) lane reduce
    s = 10.0 * jnp.tanh(s)
    out_ref[...] = jnp.where(mask_ref[...] != 0, -jnp.inf, s)


# ----------------------------- sizing helpers --------------------------------


def _vmem_budget_bytes():
    """Explicit, chip-aware scoped-VMEM limit (v7x has only 64 MiB physical)."""
    cap = None
    try:
        info = pltpu.get_tpu_info()
        for name in ("vmem_capacity_bytes", "vmem_size_bytes", "vmem_bytes"):
            if hasattr(info, name):
                cap = int(getattr(info, name))
                break
    except Exception:
        cap = None
    if not cap:
        cap = 64 * 1024 * 1024          # assume the most restrictive (v7x per-TC)
    return min((cap * 3) // 4, 96 * 1024 * 1024)


def _choose_block_b(B, N, d_unit, elem_bytes, max_block_bytes):
    """Batch rows per grid step, sized directly from the per-tile byte budget.

    Rounded to a multiple of 32 so the int8 mask ((32,128) native tile) and
    bf16 refs ((16,128)) blocks lower cleanly; full-extent for tiny B.
    """
    row_bytes = max(1, N * d_unit * elem_bytes)
    bb = max_block_bytes // row_bytes
    if bb >= B:
        if B >= 64:
            # Split into (at least) two blocks so v7x's two TCs both get work.
            half = -(-B // 2)
            bb = min(B, -(-half // 32) * 32)
        else:
            return B                     # tiny problem: full-extent batch block
    bb = max(32, (bb // 32) * 32)
    bb = min(bb, B)
    # Prefer an even (balanced) grid when the grid is short (v7x 2-TC split).
    g = -(-B // bb)
    if 1 < g <= 8 and g % 2 == 1:
        bb_alt = max(32, bb - 32)
        if bb_alt < bb and -(-B // bb_alt) % 2 == 0:
            bb = bb_alt
    return bb


# ----------------------------- wrapper ---------------------------------------


def pointer_forward(refs, query, mask, w_l, v, *, block_b=None):
    """refs: [B, N, d_unit] (pass bf16 for best HBM throughput; f32 also OK),
    query: [B, d_query], mask: [B, N] bool,
    w_l: [d_unit, d_query] (PyTorch Linear weight layout), v: [d_unit]."""
    B, N, d_unit = refs.shape
    d_query = query.shape[-1]

    query = query.astype(jnp.float32)
    wt = jnp.asarray(w_l, jnp.float32).T                 # (d_query, d_unit)
    v = jnp.asarray(v, jnp.float32)
    mask_i8 = mask.astype(jnp.int8)                      # 1 byte/elem HBM stream

    elem_bytes = jnp.dtype(refs.dtype).itemsize
    vmem_limit = _vmem_budget_bytes()
    max_block_bytes = min(vmem_limit // 8, 8 * 1024 * 1024)

    bb = block_b if block_b is not None else _choose_block_b(
        B, N, d_unit, elem_bytes, max_block_bytes)
    bb = max(1, min(bb, B))
    grid = (pl.cdiv(B, bb),)            # ragged final block; no jnp.pad copy

    compiler_params = pltpu.CompilerParams(
        dimension_semantics=("parallel",),   # v7x: row blocks split across both TCs
        vmem_limit_bytes=int(vmem_limit),
    )

    if d_unit < 128:
        # Lane-dense layout: merge (N, d_unit) into one trailing dim (free,
        # contiguous reshape) and do the v-weighted reduce on the MXU.
        refs2 = refs.reshape(B, N * d_unit)
        wt_tiled = jnp.tile(wt, (1, N))                          # (d_query, N*d_unit)
        eye = jnp.eye(N, dtype=jnp.float32)
        vmat = (eye[:, None, :] * v[None, :, None]).reshape(N * d_unit, N)

        out = pl.pallas_call(
            _pointer_kernel_flat,
            out_shape=jax.ShapeDtypeStruct((B, N), jnp.float32),
            grid_spec=pltpu.PrefetchScalarGridSpec(
                num_scalar_prefetch=0,
                grid=grid,
                in_specs=[
                    pl.BlockSpec((bb, N * d_unit), lambda b: (b, 0)),       # refs (lane-dense)
                    pl.BlockSpec((bb, d_query), lambda b: (b, 0)),          # query
                    pl.BlockSpec((d_query, N * d_unit), lambda b: (0, 0)),  # W_l.T tiled (invariant)
                    pl.BlockSpec((N * d_unit, N), lambda b: (0, 0)),        # block-diag v (invariant)
                    pl.BlockSpec((bb, N), lambda b: (b, 0)),                # mask (int8)
                ],
                out_specs=pl.BlockSpec((bb, N), lambda b: (b, 0)),
            ),
            compiler_params=compiler_params,
        )(refs2, query, wt_tiled, vmat, mask_i8)
    else:
        v2 = v.reshape(1, d_unit)
        out = pl.pallas_call(
            _pointer_kernel_3d,
            out_shape=jax.ShapeDtypeStruct((B, N), jnp.float32),
            grid_spec=pltpu.PrefetchScalarGridSpec(
                num_scalar_prefetch=0,
                grid=grid,
                in_specs=[
                    pl.BlockSpec((bb, N, d_unit), lambda b: (b, 0, 0)),     # refs
                    pl.BlockSpec((bb, d_query), lambda b: (b, 0)),          # query
                    pl.BlockSpec((d_query, d_unit), lambda b: (0, 0)),      # W_l.T (invariant)
                    pl.BlockSpec((1, d_unit), lambda b: (0, 0)),            # v (invariant)
                    pl.BlockSpec((bb, N), lambda b: (b, 0)),                # mask (int8)
                ],
                out_specs=pl.BlockSpec((bb, N), lambda b: (b, 0)),
            ),
            compiler_params=compiler_params,
        )(refs, query, wt, v2, mask_i8)

    return out


def pointer_reference(refs, query, mask, w_l, v):
    proj = query @ w_l.T                                  # [B, d_unit]
    scores = jnp.sum(v * jnp.tanh(refs + proj[:, None, :]), -1)
    scores = 10.0 * jnp.tanh(scores)
    return jnp.where(mask, -jnp.inf, scores)


if __name__ == "__main__":
    B, N, d_query, d_unit = 2, 8, 32, 32

    key = jax.random.PRNGKey(0)
    k_refs, k_q, k_w, k_v, k_m = jax.random.split(key, 5)

    # Deterministic parameter init mirroring the PyTorch module's __init__:
    #   nn.Linear(d_query, d_unit, bias=False): weight ~ U(-1/sqrt(d_query), 1/sqrt(d_query))
    #   v ~ U(-1/sqrt(d_unit), 1/sqrt(d_unit))
    w_bound = 1.0 / math.sqrt(d_query)
    v_bound = 1.0 / math.sqrt(d_unit)
    w_l = jax.random.uniform(k_w, (d_unit, d_query), jnp.float32, -w_bound, w_bound)
    v = jax.random.uniform(k_v, (d_unit,), jnp.float32, -v_bound, v_bound)

    refs_f32 = jax.random.normal(k_refs, (B, N, d_unit), jnp.float32)
    refs = refs_f32.astype(jnp.bfloat16)     # stream refs in bf16 (half the HBM bytes)
    query = jax.random.normal(k_q, (B, d_query), jnp.float32)
    mask = jax.random.uniform(k_m, (B, N)) < 0.3   # bool [B, N]

    out = jax.block_until_ready(pointer_forward(refs, query, mask, w_l, v))

    # Reference computed on the same bf16-rounded refs (all in-kernel math is
    # f32), so only accumulation-order / tanh-impl differences remain.
    ref = pointer_reference(refs.astype(jnp.float32), query, mask, w_l, v)
    assert out.shape == (B, N)
    assert bool(jnp.allclose(out, ref, atol=1e-3, rtol=1e-3)), "mismatch vs reference"

    print("KERNEL_OK")
</pallas_src>

<mosaic_0001>
module attributes {stable_mosaic.version = 11 : i64} {
  func.func @_pointer_kernel_flat(%arg0: i32, %arg1: memref<2x256xbf16, #tpu.memory_space<vmem>>, %arg2: memref<2x32xf32, #tpu.memory_space<vmem>>, %arg3: memref<32x256xf32, #tpu.memory_space<vmem>>, %arg4: memref<256x8xf32, #tpu.memory_space<vmem>>, %arg5: memref<2x8xi8, #tpu.memory_space<vmem>>, %arg6: memref<2x8xf32, #tpu.memory_space<vmem>>) attributes {dimension_semantics = [#tpu.dimension_semantics<parallel>], iteration_bounds = array<i64: 1>, scalar_prefetch = 0 : i64, scratch_operands = 0 : i64, tpu.core_type = #tpu.core_type<tc>, window_params = [{transform_indices = @transform_0, window_bounds = array<i64: 2, 256>}, {transform_indices = @transform_1, window_bounds = array<i64: 2, 32>}, {pipeline_mode = #tpu.pipeline_mode<synchronous>, transform_indices = @transform_2, window_bounds = array<i64: 32, 256>}, {pipeline_mode = #tpu.pipeline_mode<synchronous>, transform_indices = @transform_3, window_bounds = array<i64: 256, 8>}, {transform_indices = @transform_4, window_bounds = array<i64: 2, 8>}, {transform_indices = @transform_5, window_bounds = array<i64: 2, 8>}]} {
    %c0 = arith.constant 0 : index
    %c0_0 = arith.constant 0 : index
    %0 = vector.load %arg2[%c0, %c0_0] : memref<2x32xf32, #tpu.memory_space<vmem>>, vector<2x32xf32>
    %c0_1 = arith.constant 0 : index
    %c0_2 = arith.constant 0 : index
    %1 = vector.load %arg3[%c0_1, %c0_2] : memref<32x256xf32, #tpu.memory_space<vmem>>, vector<32x256xf32>
    %cst = arith.constant dense<0.000000e+00> : vector<2x256xf32>
    %2 = tpu.matmul %0, %1, %cst {dimension_numbers = #tpu.dot_dimension_numbers<[1], [0], [0], [1], [0, 0, 1, 1], [], []>} : vector<2x32xf32>, vector<32x256xf32>, vector<2x256xf32> -> vector<2x256xf32>
    %c0_3 = arith.constant 0 : index
    %c0_4 = arith.constant 0 : index
    %3 = vector.load %arg1[%c0_3, %c0_4] : memref<2x256xbf16, #tpu.memory_space<vmem>>, vector<2x256xbf16>
    %4 = arith.extf %3 : vector<2x256xbf16> to vector<2x256xf32>
    %5 = arith.addf %4, %2 : vector<2x256xf32>
    %6 = math.tanh %5 : vector<2x256xf32>
    %c0_5 = arith.constant 0 : index
    %c0_6 = arith.constant 0 : index
    %7 = vector.load %arg4[%c0_5, %c0_6] : memref<256x8xf32, #tpu.memory_space<vmem>>, vector<256x8xf32>
    %cst_7 = arith.constant dense<0.000000e+00> : vector<2x8xf32>
    %8 = tpu.matmul %6, %7, %cst_7 {dimension_numbers = #tpu.dot_dimension_numbers<[1], [0], [0], [1], [0, 0, 1, 1], [], []>} : vector<2x256xf32>, vector<256x8xf32>, vector<2x8xf32> -> vector<2x8xf32>
    %9 = math.tanh %8 : vector<2x8xf32>
    %cst_8 = arith.constant 1.000000e+01 : f32
    %10 = vector.broadcast %cst_8 : f32 to vector<2x8xf32>
    %11 = arith.mulf %10, %9 : vector<2x8xf32>
    %c0_9 = arith.constant 0 : index
    %c0_10 = arith.constant 0 : index
    %12 = vector.load %arg5[%c0_9, %c0_10] : memref<2x8xi8, #tpu.memory_space<vmem>>, vector<2x8xi8>
    %c0_i8 = arith.constant 0 : i8
    %13 = vector.broadcast %c0_i8 : i8 to vector<2x8xi8>
    %14 = arith.cmpi ne, %12, %13 : vector<2x8xi8>
    %cst_11 = arith.constant 0xFF800000 : f32
    %15 = vector.broadcast %cst_11 : f32 to vector<2x8xf32>
    %16 = arith.select %14, %15, %11 : vector<2x8xi1>, vector<2x8xf32>
    %c0_12 = arith.constant 0 : index
    %c0_13 = arith.constant 0 : index
    %17 = vector.load %arg6[%c0_12, %c0_13] : memref<2x8xf32, #tpu.memory_space<vmem>>, vector<2x8xf32>
    tpu.vector_store %arg6[%c0_12, %c0_13], %16 {strides = array<i32>} : memref<2x8xf32, #tpu.memory_space<vmem>>, vector<2x8xf32>,
    return
  }
  func.func @transform_0(%arg0: i32) -> (i32, i32) {
    %c0_i32 = arith.constant 0 : i32
    %c0_i32_0 = arith.constant 0 : i32
    return %arg0, %c0_i32 : i32, i32
  }
  func.func @transform_1(%arg0: i32) -> (i32, i32) {
    %c0_i32 = arith.constant 0 : i32
    %c0_i32_0 = arith.constant 0 : i32
    return %arg0, %c0_i32 : i32, i32
  }
  func.func @transform_2(%arg0: i32) -> (i32, i32) {
    %c0_i32 = arith.constant 0 : i32
    %c0_i32_0 = arith.constant 0 : i32
    %c0_i32_1 = arith.constant 0 : i32
    return %c0_i32, %c0_i32_0 : i32, i32
  }
  func.func @transform_3(%arg0: i32) -> (i32, i32) {
    %c0_i32 = arith.constant 0 : i32
    %c0_i32_0 = arith.constant 0 : i32
    %c0_i32_1 = arith.constant 0 : i32
    return %c0_i32, %c0_i32_0 : i32, i32
  }
  func.func @transform_4(%arg0: i32) -> (i32, i32) {
    %c0_i32 = arith.constant 0 : i32
    %c0_i32_0 = arith.constant 0 : i32
    return %arg0, %c0_i32 : i32, i32
  }
  func.func @transform_5(%arg0: i32) -> (i32, i32) {
    %c0_i32 = arith.constant 0 : i32
    %c0_i32_0 = arith.constant 0 : i32
    return %arg0, %c0_i32 : i32, i32
  }
}

</mosaic_0001>

<llo_original>
// kernel: tpu_custom_call.1
$region0: #{tpu_custom_call.1}
  #allocation0 [shape = 'u32[]', space=smem, size = 0x4, offset = 0x4, fixed_abs, tag = 'smem constant byte address 0x4 - core index']
  #allocation1 [shape = 'u32[72,128]{1,0:T(1,128)}', space=vmem, size = 0x9000, scoped, tag = 'internal scratch']
  %s0 = inlined_call_operand.vmem [shape: bf16[2,256], index: 0, kind: input, shape index: {}]
  %s1 = inlined_call_operand.vmem [shape: f32[2,32], index: 1, kind: input, shape index: {}]
  %s2 = inlined_call_operand.vmem [shape: f32[32,256], index: 2, kind: input, shape index: {}]
  %s3 = inlined_call_operand.vmem [shape: f32[256,8], index: 3, kind: input, shape index: {}]
  %s4 = inlined_call_operand.vmem [shape: s8[2,8], index: 4, kind: input, shape index: {}]
  %s5 = inlined_call_operand.hbm [shape: f32[2,8], index: 5, kind: output, shape index: {}]
  %s6 = sld [smem:[#allocation0]]
  $region30: #{tpu_custom_call.1} parent=0
    _
  %s8 = ssub.s32 1, %s6
  %s9 = scalar_select 0, %s8, %s6
  $region1: #{tpu_custom_call.1} parent=0
    #allocation2 [shape = 'u8[1024]{0}', space=vmem, size = 0x400, scoped, tag = 'output window, operand 0, single buffered']
    #allocation3 [shape = 's32[1]{0}', space=sflag, size = 0x4, scoped, tag = 'scoped memory for tpu_custom_call.1']
    %10 = vsyncpa [#allocation3], 0
    // Predicated region
    $region2: #{tpu_custom_call.1} parent=1 // pred_check
      _
    $region3: #{tpu_custom_call.1} parent=1 // pred_check_branch
      %12 = sbr.rel (0) target = $region5
    $region4: #{tpu_custom_call.1} parent=1 // pred_region
      _
    $region5: #{tpu_custom_call.1} parent=1 // pred_fallthru
      _
    // Predicated region
    $region6: #{tpu_custom_call.1} parent=1 // pred_check
      _
    $region7: #{tpu_custom_call.1} parent=1 // pred_check_branch
      %14 = sbr.rel (0) target = $region9
    $region8: #{tpu_custom_call.1} parent=1 // pred_region
      _
    $region9: #{tpu_custom_call.1} parent=1 // pred_fallthru
      _
    // Predicated region
    $region10: #{tpu_custom_call.1} parent=1 // pred_check
      _
    $region11: #{tpu_custom_call.1} parent=1 // pred_check_branch
      %16 = sbr.rel (0) target = $region13
    $region12: #{tpu_custom_call.1} parent=1 // pred_region
      _
    $region13: #{tpu_custom_call.1} parent=1 // pred_fallthru
      _
    // Predicated region
    $region14: #{tpu_custom_call.1} parent=1 // pred_check
      _
    $region15: #{tpu_custom_call.1} parent=1 // pred_check_branch
      %18 = sbr.rel (0) target = $region17
    $region16: #{tpu_custom_call.1} parent=1 // pred_region
      _
    $region17: #{tpu_custom_call.1} parent=1 // pred_fallthru
      _
    // Predicated region
    $region18: #{tpu_custom_call.1} parent=1 // pred_check
      _
    $region19: #{tpu_custom_call.1} parent=1 // pred_check_branch
      %20 = sbr.rel (0) target = $region21
    $region20: #{tpu_custom_call.1} parent=1 // pred_region
      _
    $region21: #{tpu_custom_call.1} parent=1 // pred_fallthru
      _
    %v23 = vld [vmem:[%s1] sm:$0x3]
    %v24 = vld [vmem:[%s2] sm:$0xff]
    %v25 = vld [vmem:[%s2 + $0x8] sm:$0xff]
    %v26 = vld [vmem:[%s2 + $0x10] sm:$0xff]
    %v27 = vld [vmem:[%s2 + $0x18] sm:$0xff]
    %v28 = vld [vmem:[%s2 + $0x20] sm:$0xff]
    %v29 = vld [vmem:[%s2 + $0x28] sm:$0xff]
    %v30 = vld [vmem:[%s2 + $0x30] sm:$0xff]
    %v31 = vld [vmem:[%s2 + $0x38] sm:$0xff]
    %vm32 = vcmask 261120
    %v34 = vsel %vm32, %v23, 0
    %36 = vmatpush.msra.mxu0 0.0
    %37 = vmatpush.msra.mxu0 0.0
    %38 = vmatpush.msra.mxu0 0.0
    %39 = vmatpush.msra.mxu0 0.0
    %40 = vmatpush.msra.mxu0 0.0
    %41 = vmatpush.msra.mxu0 0.0
    %42 = vmatpush.msra.mxu0 0.0
    %43 = vmatpush.msra.mxu0 0.0
    %44 = vmatpush.msra.mxu0 0.0
    %45 = vmatpush.msra.mxu0 0.0
    %46 = vmatpush.msra.mxu0 0.0
    %47 = vmatpush.msra.mxu0 0.0
    %48 = vmatpush.msra.mxu0 %v30
    %49 = vmatpush.msra.mxu0 %v28
    %50 = vmatpush.msra.mxu0 %v26
    %51 = vmatpush.msra.mxu0 %v24
    %52 = vmatmul.f32.gmra.mxu0 %v34
    %v53 = vpop.f32.mrf.mxu0
    %v54 = vadd.f32 0.0, %v53
    %55 = vdwg.mxu0
    %56 = vmatpush.msra.mxu0 0.0
    %57 = vmatpush.msra.mxu0 0.0
    %58 = vmatpush.msra.mxu0 0.0
    %59 = vmatpush.msra.mxu0 0.0
    %60 = vmatpush.msra.mxu0 0.0
    %61 = vmatpush.msra.mxu0 0.0
    %62 = vmatpush.msra.mxu0 0.0
    %63 = vmatpush.msra.mxu0 0.0
    %64 = vmatpush.msra.mxu0 0.0
    %65 = vmatpush.msra.mxu0 0.0
    %66 = vmatpush.msra.mxu0 0.0
    %67 = vmatpush.msra.mxu0 0.0
    %68 = vmatpush.msra.mxu0 %v31
    %69 = vmatpush.msra.mxu0 %v29
    %70 = vmatpush.msra.mxu0 %v27
    %71 = vmatpush.msra.mxu0 %v25
    %72 = vmatmul.f32.gmra.mxu0 %v34
    %v73 = vpop.f32.mrf.mxu0
    %v74 = vadd.f32 0.0, %v73
    %75 = vdwg.mxu0
    %v76 = vld [vmem:[%s0] sm:$0x3]
    %v77 = vunpack.c.l.bf16 %v76
    %v80 = vrot.slane %v74, 6
    %vm81 = vcmask 1041408
    %v82 = vsel %vm81, %v54, %v80
    %v84 = vadd.f32 %v77, %v82
    %v85 = vtanh.pop %v84
    %v86 = vld [vmem:[%s3] sm:$0xff]
    %v87 = vld [vmem:[%s3 + $0x8] sm:$0xff]
    %v88 = vld [vmem:[%s3 + $0x10] sm:$0xff]
    %v89 = vld [vmem:[%s3 + $0x18] sm:$0xff]
    %v90 = vld [vmem:[%s3 + $0x20] sm:$0xff]
    %v91 = vld [vmem:[%s3 + $0x28] sm:$0xff]
    %v92 = vld [vmem:[%s3 + $0x30] sm:$0xff]
    %v93 = vld [vmem:[%s3 + $0x38] sm:$0xff]
    %v94 = vld [vmem:[%s3 + $0x40] sm:$0xff]
    %v95 = vld [vmem:[%s3 + $0x48] sm:$0xff]
    %v96 = vld [vmem:[%s3 + $0x50] sm:$0xff]
    %v97 = vld [vmem:[%s3 + $0x58] sm:$0xff]
    %v98 = vld [vmem:[%s3 + $0x60] sm:$0xff]
    %v99 = vld [vmem:[%s3 + $0x68] sm:$0xff]
    %v100 = vld [vmem:[%s3 + $0x70] sm:$0xff]
    %v101 = vld [vmem:[%s3 + $0x78] sm:$0xff]
    %v102 = vld [vmem:[%s3 + $0x80] sm:$0xff]
    %v103 = vld [vmem:[%s3 + $0x88] sm:$0xff]
    %v104 = vld [vmem:[%s3 + $0x90] sm:$0xff]
    %v105 = vld [vmem:[%s3 + $0x98] sm:$0xff]
    %v106 = vld [vmem:[%s3 + $0xa0] sm:$0xff]
    %v107 = vld [vmem:[%s3 + $0xa8] sm:$0xff]
    %v108 = vld [vmem:[%s3 + $0xb0] sm:$0xff]
    %v109 = vld [vmem:[%s3 + $0xb8] sm:$0xff]
    %v110 = vld [vmem:[%s3 + $0xc0] sm:$0xff]
    %v111 = vld [vmem:[%s3 + $0xc8] sm:$0xff]
    %v112 = vld [vmem:[%s3 + $0xd0] sm:$0xff]
    %v113 = vld [vmem:[%s3 + $0xd8] sm:$0xff]
    %v114 = vld [vmem:[%s3 + $0xe0] sm:$0xff]
    %v115 = vld [vmem:[%s3 + $0xe8] sm:$0xff]
    %v116 = vld [vmem:[%s3 + $0xf0] sm:$0xff]
    %v117 = vld [vmem:[%s3 + $0xf8] sm:$0xff]
    %119 = vst [vmem:[#allocation1] ss:$4 sm:$0xff] %v85
    %v120 = vld.sshfl [vmem:[#allocation1] sm:$0xff pattern:$0x73625140]
    %v121 = vld.sshfl [vmem:[#allocation1 + $0x8] sm:$0xff pattern:$0x73625140]
    %124 = vmatpush.msra.mxu0 %v101
    %125 = vmatpush.msra.mxu0 %v100
    %126 = vmatpush.msra.mxu0 %v99
    %127 = vmatpush.msra.mxu0 %v98
    %128 = vmatpush.msra.mxu0 %v97
    %129 = vmatpush.msra.mxu0 %v96
    %130 = vmatpush.msra.mxu0 %v95
    %131 = vmatpush.msra.mxu0 %v94
    %132 = vmatpush.msra.mxu0 %v93
    %133 = vmatpush.msra.mxu0 %v92
    %134 = vmatpush.msra.mxu0 %v91
    %135 = vmatpush.msra.mxu0 %v90
    %136 = vmatpush.msra.mxu0 %v89
    %137 = vmatpush.msra.mxu0 %v88
    %138 = vmatpush.msra.mxu0 %v87
    %139 = vmatpush.msra.mxu0 %v86
    %140 = vmatmul.f32.gmra.mxu0 %v120
    %v141 = vpop.f32.mrf.mxu0
    %v142 = vadd.f32 0.0, %v141
    %143 = vdwg.mxu0
    %144 = vmatpush.msra.mxu0 %v117
    %145 = vmatpush.msra.mxu0 %v116
    %146 = vmatpush.msra.mxu0 %v115
    %147 = vmatpush.msra.mxu0 %v114
    %148 = vmatpush.msra.mxu0 %v113
    %149 = vmatpush.msra.mxu0 %v112
    %150 = vmatpush.msra.mxu0 %v111
    %151 = vmatpush.msra.mxu0 %v110
    %152 = vmatpush.msra.mxu0 %v109
    %153 = vmatpush.msra.mxu0 %v108
    %154 = vmatpush.msra.mxu0 %v107
    %155 = vmatpush.msra.mxu0 %v106
    %156 = vmatpush.msra.mxu0 %v105
    %157 = vmatpush.msra.mxu0 %v104
    %158 = vmatpush.msra.mxu0 %v103
    %159 = vmatpush.msra.mxu0 %v102
    %160 = vmatmul.f32.gmra.mxu0 %v121
    %v161 = vpop.f32.mrf.mxu0
    %v162 = vadd.f32 %v142, %v161
    %163 = vdwg.mxu0
    %v164 = vtanh.pop %v162
    %v165 = vmul.f32 %v164, 10.0
    %v166 = vld [vmem:[%s4] sm:$0x1]
    %vm167 = vnez %v166
    %v168 = vsel %vm167, 16843009, 0
    %v169 = vunpack.c.0.s8 %v168
    %vm170 = vcmp.ne.s32.totalorder %v169, 0
    %v171 = vsel %vm170, -inf, %v165
    %vm172 = vcmask 58368
    %173 = vst.msk [vmem:[#allocation2] sm:$0x3] %vm172, %v171
    // Predicated region
    $region22: #{tpu_custom_call.1} parent=1 // pred_check
      _
    $region23: #{tpu_custom_call.1} parent=1 // pred_check_branch
      %175 = sbr.rel (0) target = $region25
    $region24: #{tpu_custom_call.1} parent=1 // pred_region
      %177 = vsyncadd [#allocation3], 0
      %s179 = sshll.u32 [#allocation2], 4
      %s180 = int_to_ptr.vmem [resolvable:$true] %s179
      %s181 = sshll.u32 %s5, 4
      %s182 = int_to_ptr.hbm [resolvable:$true] %s181
      %184 = dma.vmem_to_hbm [thread:$0]  %s180, 32, %s182, [#allocation3]
    $region25: #{tpu_custom_call.1} parent=1 // pred_fallthru
      _
    // Predicated region
    $region26: #{tpu_custom_call.1} parent=1 // pred_check
      _
    $region27: #{tpu_custom_call.1} parent=1 // pred_check_branch
      %186 = sbr.rel (0) target = $region29
    $region28: #{tpu_custom_call.1} parent=1 // pred_region
      %188 = dma.done [#allocation3], 32
    $region29: #{tpu_custom_call.1} parent=1 // pred_fallthru
      _
    %189 = vsyncpa [#allocation3], 1

</llo_original>
